<compile_context>
chip_gen: v7x
topology: tpu7x:2x2x1
jax: 0.10.0
libtpu: 0.0.40
codegen_flags: <defaults>
</compile_context>

<pallas_src>
import functools

import numpy as np
import jax
import jax.numpy as jnp
from jax import lax
from jax.experimental import pallas as pl
from jax.experimental.pallas import tpu as pltpu


def _round_up(n, m):
    return ((n + m - 1) // m) * m


# ------------------------------- Pallas kernels ------------------------------ #
def _conv_matmul_kernel(w_ref, p_ref, y_ref):
    # w_ref: (C_out, K)      3x3 conv weight reshaped, resident across the grid
    # p_ref: (1, K, tn)      im2col patch tile of one batch element
    # y_ref: (1, C_out, tn)  conv output tile (f32 accumulation)
    y_ref[0] = jnp.dot(w_ref[...], p_ref[0], preferred_element_type=jnp.float32)


def _bn_relu_kernel(y_ref, scale_ref, shift_ref, o_ref, *, act):
    # Fused BatchNorm (per-channel affine) + optional ReLU epilogue:
    #   out = max(y * scale + shift, 0)
    z = y_ref[0] * scale_ref[...] + shift_ref[...]
    if act:
        z = jnp.maximum(z, 0.0)
    o_ref[0] = z


# --------------------------------- wrappers ---------------------------------- #
def _conv3x3_pallas(patches, w2, tn):
    B, K, Np = patches.shape
    C_out = w2.shape[0]
    nj = Np // tn
    return pl.pallas_call(
        _conv_matmul_kernel,
        out_shape=jax.ShapeDtypeStruct((B, C_out, Np), jnp.float32),
        grid_spec=pltpu.PrefetchScalarGridSpec(
            num_scalar_prefetch=0,
            grid=(B, nj),
            in_specs=[
                pl.BlockSpec((C_out, K), lambda b, j: (0, 0)),       # weight (resident)
                pl.BlockSpec((1, K, tn), lambda b, j: (b, 0, j)),    # patches tile
            ],
            out_specs=pl.BlockSpec((1, C_out, tn), lambda b, j: (b, 0, j)),
        ),
        compiler_params=pltpu.CompilerParams(
            dimension_semantics=("parallel", "parallel")),
    )(w2, patches)


def _bn_relu_pallas(y, scale, shift, tn, act):
    B, C_out, Np = y.shape
    nj = Np // tn
    return pl.pallas_call(
        functools.partial(_bn_relu_kernel, act=act),
        out_shape=jax.ShapeDtypeStruct((B, C_out, Np), jnp.float32),
        grid_spec=pltpu.PrefetchScalarGridSpec(
            num_scalar_prefetch=0,
            grid=(B, nj),
            in_specs=[
                pl.BlockSpec((1, C_out, tn), lambda b, j: (b, 0, j)),  # conv output tile
                pl.BlockSpec((C_out, 1), lambda b, j: (0, 0)),         # scale (tiny, resident)
                pl.BlockSpec((C_out, 1), lambda b, j: (0, 0)),         # shift (tiny, resident)
            ],
            out_specs=pl.BlockSpec((1, C_out, tn), lambda b, j: (b, 0, j)),
        ),
        compiler_params=pltpu.CompilerParams(
            dimension_semantics=("parallel", "parallel")),
    )(y, scale, shift)


def conv_block_forward(x, weight, *, act=True, eps=1e-5):
    """ConvBlock forward: Conv2d(3x3, s=1, p=1, d=1, bias=False) -> BN2d(train) -> ReLU."""
    B, C_in, H, W = x.shape
    C_out, C_in_w, KH, KW = weight.shape
    assert C_in_w == C_in and KH == 3 and KW == 3
    # TODO(synk): only the ConvBlock defaults (kernel=3, stride=1, padding=1, dilation=1,
    # bias=False) are implemented; other strides/dilations need a different im2col.

    N = H * W
    K = C_in * 9

    # im2col in the wrapper (layout plumbing only), producing a lane-dense (K, N)
    # operand so the kernel does a straight MXU matmul (no in-kernel transposes).
    x_pad = jnp.pad(x, ((0, 0), (0, 0), (1, 1), (1, 1)))
    cols = [x_pad[:, :, kh:kh + H, kw:kw + W] for kh in range(3) for kw in range(3)]
    patches = jnp.stack(cols, axis=2).reshape(B, K, N)        # (B, C_in*9, H*W)
    w2 = weight.reshape(C_out, K).astype(jnp.float32)

    # Tile the flattened spatial dim: multiple of 128 (unmasked stores), VMEM per
    # grid step independent of the image size.
    tn = min(_round_up(N, 128), 1024)
    Np = _round_up(N, tn)
    if Np != N:
        patches = jnp.pad(patches, ((0, 0), (0, 0), (0, Np - N)))

    y = _conv3x3_pallas(patches, w2, tn)                      # (B, C_out, Np) f32

    # BatchNorm2d training-mode statistics (biased variance, weight=1, bias=0):
    # a tiny per-channel cross-batch reduction -> plain JAX between the two kernels.
    y_valid = y[:, :, :N]
    mean = jnp.mean(y_valid, axis=(0, 2))
    var = jnp.mean(jnp.square(y_valid - mean[None, :, None]), axis=(0, 2))
    inv_std = lax.rsqrt(var + eps)
    scale = inv_std.reshape(C_out, 1).astype(jnp.float32)
    shift = (-mean * inv_std).reshape(C_out, 1).astype(jnp.float32)

    out = _bn_relu_pallas(y, scale, shift, tn, act)           # fused affine + ReLU
    return out[:, :, :N].reshape(B, C_out, H, W)


# ------------------------------ pure-JAX reference --------------------------- #
def reference_forward(x, weight, *, act=True, eps=1e-5):
    y = lax.conv_general_dilated(
        x, weight, window_strides=(1, 1), padding=((1, 1), (1, 1)),
        dimension_numbers=("NCHW", "OIHW", "NCHW"))
    mean = jnp.mean(y, axis=(0, 2, 3), keepdims=True)
    var = jnp.mean(jnp.square(y - mean), axis=(0, 2, 3), keepdims=True)
    y = (y - mean) * lax.rsqrt(var + eps)
    return jnp.maximum(y, 0.0) if act else y


# ------------------------------------ main ----------------------------------- #
if __name__ == "__main__":
    B, C_in, C_out, H, W = 2, 4, 8, 16, 16
    key = jax.random.PRNGKey(0)
    kx, kw = jax.random.split(key)
    x = jax.random.normal(kx, (B, C_in, H, W), jnp.float32)
    weight = jax.random.normal(kw, (C_out, C_in, 3, 3), jnp.float32) / np.sqrt(9.0 * C_in)

    out = jax.block_until_ready(conv_block_forward(x, weight, act=True))
    ref = jax.block_until_ready(reference_forward(x, weight, act=True))

    # Tolerance covers possible f32 matmul pass-decomposition differences between the
    # Mosaic MXU matmul and XLA's conv; any layout/tap-ordering bug would be O(1).
    np.testing.assert_allclose(np.asarray(out), np.asarray(ref), rtol=1e-2, atol=1e-2)
    print("KERNEL_OK")
</pallas_src>

<mosaic_0001>
module attributes {stable_mosaic.version = 11 : i64} {
  func.func @_conv_matmul_kernel(%arg0: i32, %arg1: i32, %arg2: memref<8x36xf32, #tpu.memory_space<vmem>>, %arg3: memref<1x36x256xf32, #tpu.memory_space<vmem>>, %arg4: memref<1x8x256xf32, #tpu.memory_space<vmem>>) attributes {dimension_semantics = [#tpu.dimension_semantics<parallel>, #tpu.dimension_semantics<parallel>], iteration_bounds = array<i64: 2, 1>, scalar_prefetch = 0 : i64, scratch_operands = 0 : i64, tpu.core_type = #tpu.core_type<tc>, window_params = [{pipeline_mode = #tpu.pipeline_mode<synchronous>, transform_indices = @transform_0, window_bounds = array<i64: 8, 36>}, {transform_indices = @transform_1, window_bounds = array<i64: 1, 36, 256>}, {transform_indices = @transform_2, window_bounds = array<i64: 1, 8, 256>}]} {
    %c0 = arith.constant 0 : index
    %c0_0 = arith.constant 0 : index
    %0 = vector.load %arg2[%c0, %c0_0] : memref<8x36xf32, #tpu.memory_space<vmem>>, vector<8x36xf32>
    %c0_1 = arith.constant 0 : index
    %c0_2 = arith.constant 0 : index
    %c0_3 = arith.constant 0 : index
    %1 = vector.load %arg3[%c0_1, %c0_2, %c0_3] : memref<1x36x256xf32, #tpu.memory_space<vmem>>, vector<1x36x256xf32>
    %2 = vector.shape_cast %1 : vector<1x36x256xf32> to vector<36x256xf32>
    %cst = arith.constant dense<0.000000e+00> : vector<8x256xf32>
    %3 = tpu.matmul %0, %2, %cst {dimension_numbers = #tpu.dot_dimension_numbers<[1], [0], [0], [1], [0, 0, 1, 1], [], []>} : vector<8x36xf32>, vector<36x256xf32>, vector<8x256xf32> -> vector<8x256xf32>
    %c0_4 = arith.constant 0 : index
    %c0_5 = arith.constant 0 : index
    %c0_6 = arith.constant 0 : index
    %4 = vector.load %arg4[%c0_4, %c0_5, %c0_6] : memref<1x8x256xf32, #tpu.memory_space<vmem>>, vector<1x8x256xf32>
    %5 = vector.shape_cast %4 : vector<1x8x256xf32> to vector<8x256xf32>
    %6 = vector.shape_cast %3 : vector<8x256xf32> to vector<1x8x256xf32>
    tpu.vector_store %arg4[%c0_4, %c0_5, %c0_6], %6 {strides = array<i32>} : memref<1x8x256xf32, #tpu.memory_space<vmem>>, vector<1x8x256xf32>,
    return
  }
  func.func @transform_0(%arg0: i32, %arg1: i32) -> (i32, i32) {
    %c0_i32 = arith.constant 0 : i32
    %c0_i32_0 = arith.constant 0 : i32
    %c0_i32_1 = arith.constant 0 : i32
    return %c0_i32, %c0_i32_0 : i32, i32
  }
  func.func @transform_1(%arg0: i32, %arg1: i32) -> (i32, i32, i32) {
    %c0_i32 = arith.constant 0 : i32
    %c0_i32_0 = arith.constant 0 : i32
    return %arg0, %c0_i32, %arg1 : i32, i32, i32
  }
  func.func @transform_2(%arg0: i32, %arg1: i32) -> (i32, i32, i32) {
    %c0_i32 = arith.constant 0 : i32
    %c0_i32_0 = arith.constant 0 : i32
    return %arg0, %c0_i32, %arg1 : i32, i32, i32
  }
}

</mosaic_0001>

<llo_original>
// kernel: tpu_custom_call.1
$region0: #{tpu_custom_call.1}
  #allocation0 [shape = 'u32[]', space=smem, size = 0x4, offset = 0x4, fixed_abs, tag = 'smem constant byte address 0x4 - core index']
  #allocation1 [shape = 'u32[144,128]{1,0:T(1,128)}', space=vmem, size = 0x12000, scoped, tag = 'internal scratch']
  %s0 = inlined_call_operand.vmem [shape: f32[8,36], index: 0, kind: input, shape index: {}]
  %s1 = inlined_call_operand.vmem [shape: f32[2,36,256], index: 1, kind: input, shape index: {}]
  %s2 = inlined_call_operand.hbm [shape: f32[2,8,256], index: 2, kind: output, shape index: {}]
  %s3 = sld [smem:[#allocation0]]
  $region41: #{tpu_custom_call.1} parent=0
    _
  %s5 = ssub.s32 1, %s3
  %s6 = scalar_select 0, %s5, %s3
  $region1: #{tpu_custom_call.1} parent=0
    #allocation2 [shape = 'u8[16384]{0}', space=vmem, size = 0x4000, scoped, tag = 'output window, operand 0']
    #allocation3 [shape = 's32[2]{0}', space=sflag, size = 0x8, scoped, tag = 'scoped memory for tpu_custom_call.1']
    %7 = vsyncpa [#allocation3], 0
    %s8 = scalar_lea.sflag [#allocation3], 1
    %9 = vsyncpa %s8, 0
    loop: start=0, step=1, limit=4
    $region2: #{tpu_custom_call.1} parent=1 // loop_pre_header
      _
    $region3: #{tpu_custom_call.1} parent=1 // loop_header
      %s11 = sphi 0, %s15
      %p12 = scmp.ge.s32.totalorder %s11, 4
      %s18 = sphi 0, %s30
      %s19 = sphi 0, %s26
      %s20 = sphi 0, %s18
      %s21 = sphi 0, %s19
      %s22 = sphi 0, %s20
      %s23 = sphi 0, %s21
      %s31 = sphi 0, %s31
      %s33 = sphi 0, %s31
      %s34 = sphi 0, %s33
      %s48 = sphi 0, %s34
      %s56 = sphi 0, %s58
      %s59 = sphi 0, %s56
      %s60 = sphi 0, %s59
      %s76 = sphi 0, %s60
      %s84 = sphi 0, %s86
      %s87 = sphi 0, %s84
      %s88 = sphi 0, %s87
      %s104 = sphi 0, %s88
    $region4: #{tpu_custom_call.1} parent=1 // loop_header_branch
      %14 = sbr.rel (%p12) target = $region8
    $region5: #{tpu_custom_call.1} parent=1 // loop_body
      %s16 = ssub.s32 %s11, 1
      %s17 = ssub.s32 %s11, 2
      %s24 = sadd.s32 1, %s19
      %p25 = scmp.ge.s32.totalorder %s24, 1
      %s26 = scalar_select %p25, 0, %s24
      %s27 = sadd.s32 1, %s18
      %s28 = scalar_select %p25, %s27, %s18
      %p29 = scmp.ge.s32.totalorder %s28, 2
      %s30 = scalar_select %p29, 0, %s28
      %s32 = sadd.s32 %s31, 1
      %p35 = scmp.eq.s32.totalorder %s11, 1
      %p36 = scmp.ne.s32.totalorder %s31, %s33
      %p37 = scmp.eq.s32.totalorder %s11, 0
      %p38 = por %p36, %p37
      %p39 = scmp.ne.s32.totalorder %s31, %s33
      %p40 = scmp.eq.s32.totalorder %s16, 1
      %p41 = por %p39, %p40
      %p42 = scmp.ne.s32.totalorder %s33, %s34
      %p43 = scmp.eq.s32.totalorder %s16, 0
      %p44 = por %p42, %p43
      %p45 = scmp.ne.s32.totalorder %s33, %s34
      %p46 = scmp.eq.s32.totalorder %s17, 1
      %p47 = por %p45, %p46
      %p49 = scmp.ne.s32.totalorder %s34, %s48
      %p50 = scmp.eq.s32.totalorder %s17, 0
      %p51 = por %p49, %p50
      %s52 = ssub.s32 %s18, %s30
      %s53 = ssub.s32 %s19, %s26
      %s54 = sor.u32 %s52, %s53
      %p55 = scmp.eq.s32.totalorder %s54, 0
      %s57 = sadd.s32 %s56, 1
      %s58 = scalar_select %p55, %s56, %s57
      %p61 = pneg %p55
      %p62 = scmp.eq.s32.totalorder %s11, 1
      %p63 = por %p61, %p62
      %p64 = scmp.ne.s32.totalorder %s56, %s59
      %p65 = scmp.eq.s32.totalorder %s11, 0
      %p66 = por %p64, %p65
      %p67 = scmp.ne.s32.totalorder %s56, %s59
      %p68 = scmp.eq.s32.totalorder %s16, 1
      %p69 = por %p67, %p68
      %p70 = scmp.ne.s32.totalorder %s59, %s60
      %p71 = scmp.eq.s32.totalorder %s16, 0
      %p72 = por %p70, %p71
      %p73 = scmp.ne.s32.totalorder %s59, %s60
      %p74 = scmp.eq.s32.totalorder %s17, 1
      %p75 = por %p73, %p74
      %p77 = scmp.ne.s32.totalorder %s60, %s76
      %p78 = scmp.eq.s32.totalorder %s17, 0
      %p79 = por %p77, %p78
      %s80 = ssub.s32 %s18, %s30
      %s81 = ssub.s32 %s19, %s26
      %s82 = sor.u32 %s80, %s81
      %p83 = scmp.eq.s32.totalorder %s82, 0
      %s85 = sadd.s32 %s84, 1
      %s86 = scalar_select %p83, %s84, %s85
      %p89 = pneg %p83
      %p90 = scmp.eq.s32.totalorder %s11, 1
      %p91 = por %p89, %p90
      %p92 = scmp.ne.s32.totalorder %s84, %s87
      %p93 = scmp.eq.s32.totalorder %s11, 0
      %p94 = por %p92, %p93
      %p95 = scmp.ne.s32.totalorder %s84, %s87
      %p96 = scmp.eq.s32.totalorder %s16, 1
      %p97 = por %p95, %p96
      %p98 = scmp.ne.s32.totalorder %s87, %s88
      %p99 = scmp.eq.s32.totalorder %s16, 0
      %p100 = por %p98, %p99
      %p101 = scmp.ne.s32.totalorder %s87, %s88
      %p102 = scmp.eq.s32.totalorder %s17, 1
      %p103 = por %p101, %p102
      %p105 = scmp.ne.s32.totalorder %s88, %s104
      %p106 = scmp.eq.s32.totalorder %s17, 0
      %p107 = por %p105, %p106
      %p108 = scmp.le.s32.totalorder 1, %s11
      %p109 = scmp.lt.s32.totalorder %s11, 3
      %p110 = pnand %p108, %p109
      %p111 = pneg %p110
      // Predicated region
      $region9: #{tpu_custom_call.1} parent=5 // pred_check
        _
      $region10: #{tpu_custom_call.1} parent=5 // pred_check_branch
        %113 = sbr.rel (%p110) target = $region12
      $region11: #{tpu_custom_call.1} parent=5 // pred_region
        %s114 = ssub.s32 %s11, 1
        // Predicated region
        $region13: #{tpu_custom_call.1} parent=11 // pred_check
          %p115 = pneg %p44
        $region14: #{tpu_custom_call.1} parent=11 // pred_check_branch
          %117 = sbr.rel (%p115) target = $region16
        $region15: #{tpu_custom_call.1} parent=11 // pred_region
          _
        $region16: #{tpu_custom_call.1} parent=11 // pred_fallthru
          _
      $region12: #{tpu_custom_call.1} parent=5 // pred_fallthru
        _
      %p118 = scmp.lt.s32.totalorder %s11, 2
      // Predicated region
      $region17: #{tpu_custom_call.1} parent=5 // pred_check
        %p119 = pneg %p118
      $region18: #{tpu_custom_call.1} parent=5 // pred_check_branch
        %121 = sbr.rel (%p119) target = $region20
      $region19: #{tpu_custom_call.1} parent=5 // pred_region
        // Predicated region
        $region21: #{tpu_custom_call.1} parent=19 // pred_check
          %p122 = pneg %p66
        $region22: #{tpu_custom_call.1} parent=19 // pred_check_branch
          %124 = sbr.rel (%p122) target = $region24
        $region23: #{tpu_custom_call.1} parent=19 // pred_region
          %s125 = smul.u32 2, %s19
          %p126 = scmp.lt.s32.totalorder %s18, 1
          %s127 = scalar_select %p126, %s18, 1
          %p128 = scmp.lt.s32.totalorder %s125, 1
          %s129 = scalar_select %p128, %s125, 1
          %s130 = smul.addr %s127, 10
          %s131 = sadd.s32 %s129, %s130
          %s132 = smul.addr %s131, 8
          %s133 = scalar_lea.vmem %s1, %s132
          %s134 = smul.u32 2, %s19
        $region24: #{tpu_custom_call.1} parent=19 // pred_fallthru
          _
      $region20: #{tpu_custom_call.1} parent=5 // pred_fallthru
        _
      %p135 = scmp.le.s32.totalorder 1, %s11
      %p136 = scmp.lt.s32.totalorder %s11, 3
      %p137 = pnand %p135, %p136
      %p138 = pneg %p137
      // Predicated region
      $region25: #{tpu_custom_call.1} parent=5 // pred_check
        _
      $region26: #{tpu_custom_call.1} parent=5 // pred_check_branch
        %140 = sbr.rel (%p137) target = $region28
      $region27: #{tpu_custom_call.1} parent=5 // pred_region
        %s141 = ssub.s32 %s11, 1
        %p142 = pneg %p44
        %p143 = pneg %p41
        %s144 = smul.u32 2, %s21
        %p145 = scmp.lt.s32.totalorder %s20, 1
        %s146 = scalar_select %p145, %s20, 1
        %p147 = scmp.lt.s32.totalorder %s144, 1
        %s148 = scalar_select %p147, %s144, 1
        %s149 = smul.addr %s146, 10
        %s150 = sadd.s32 %s148, %s149
        %s151 = smul.addr %s150, 8
        %s152 = scalar_lea.vmem %s1, %s151
        %p153 = pneg %p72
        %p154 = pneg %p69
        %p155 = pneg %p100
        %p156 = pneg %p97
        %s157 = sand.u32 %s87, 1
        %s158 = scalar_lea.sflag [#allocation3], %s157
        %s159 = sand.u32 %s87, 1
        %s160 = smul.addr %s159, 16
        %s161 = scalar_lea.vmem [#allocation2], %s160
        %s162 = smul.u32 2, %s21
        %p163 = scmp.lt.s32.totalorder %s20, 1
        %s164 = scalar_select %p163, %s20, 1
        %p165 = scmp.lt.s32.totalorder %s162, 1
        %s166 = scalar_select %p165, %s162, 1
        %s167 = smul.addr %s164, 10
        %s168 = sadd.s32 %s166, %s167
        %s169 = smul.addr %s168, 8
        %s170 = scalar_lea.vmem %s1, %s169
        %s171 = smul.u32 2, %s21
        %s172 = smul.u32 2, %s21
        %v173 = vld [vmem:[%s0] sm:$0xff]
        %v174 = vld [vmem:[%s170] sm:$0xff]
        %v175 = vld [vmem:[%s170 + $0x8] sm:$0xff]
        %v176 = vld [vmem:[%s170 + $0x10] sm:$0xff]
        %v177 = vld [vmem:[%s170 + $0x18] sm:$0xff]
        %v178 = vld [vmem:[%s170 + $0x20] sm:$0xff]
        %v179 = vld [vmem:[%s170 + $0x28] sm:$0xff]
        %v180 = vld [vmem:[%s170 + $0x30] sm:$0xff]
        %v181 = vld [vmem:[%s170 + $0x38] sm:$0xff]
        %v182 = vld [vmem:[%s170 + $0x40] sm:$0xf]
        %v183 = vld [vmem:[%s170 + $0x48] sm:$0xf]
        %vm184 = vcmask 293888
        %v186 = vsel %vm184, %v173, 0
        %vm188 = vcmask 1043456
        %v190 = vsel %vm188, %v182, 0
        %v193 = vsel %vm188, %v183, 0
        %195 = vmatprep.subr.mxu0 %v175
        %196 = vmatpush1.msra.mxu0 %v174
        %197 = vmatprep.subr.mxu0 %v177
        %198 = vmatpush1.msra.mxu0 %v176
        %199 = vmatprep.subr.mxu0 %v179
        %200 = vmatpush1.msra.mxu0 %v178
        %201 = vmatprep.subr.mxu0 %v181
        %202 = vmatpush1.msra.mxu0 %v180
        %203 = vmatprep.subr.mxu0 %v193
        %204 = vmatpush1.msra.mxu0 %v190
        %205 = vmatprep.subr.mxu0 0.0
        %206 = vmatpush1.msra.mxu0 0.0
        %207 = vmatprep.subr.mxu0 0.0
        %208 = vmatpush1.msra.mxu0 0.0
        %209 = vmatprep.subr.mxu0 0.0
        %210 = vmatpush1.msra.mxu0 0.0
        %211 = vmatprep.subr.mxu0 0.0
        %212 = vmatpush1.msra.mxu0 0.0
        %213 = vmatprep.subr.mxu0 0.0
        %214 = vmatpush1.msra.mxu0 0.0
        %215 = vmatprep.subr.mxu0 0.0
        %216 = vmatpush1.msra.mxu0 0.0
        %217 = vmatprep.subr.mxu0 0.0
        %218 = vmatpush1.msra.mxu0 0.0
        %219 = vmatprep.subr.mxu0 0.0
        %220 = vmatpush1.msra.mxu0 0.0
        %221 = vmatprep.subr.mxu0 0.0
        %222 = vmatpush1.msra.mxu0 0.0
        %223 = vmatprep.subr.mxu0 0.0
        %224 = vmatpush1.msra.mxu0 0.0
        %225 = vmatprep.subr.mxu0 0.0
        %226 = vmatpush1.msra.mxu0 0.0
        %227 = vmatprep.subr.mxu0 0.0
        %228 = vmatpush1.msra.mxu0 0.0
        %229 = vmatprep.subr.mxu0 0.0
        %230 = vmatpush1.msra.mxu0 0.0
        %231 = vmatprep.subr.mxu0 0.0
        %232 = vmatpush1.msra.mxu0 0.0
        %233 = vmatprep.subr.mxu0 0.0
        %234 = vmatpush1.msra.mxu0 0.0
        %235 = vmatprep.subr.mxu0 0.0
        %236 = vmatpush1.msra.mxu0 0.0
        %237 = vmatprep.subr.mxu0 0.0
        %238 = vmatpush1.msra.mxu0 0.0
        %239 = vmatprep.subr.mxu0 0.0
        %240 = vmatpush1.msra.mxu0 0.0
        %241 = vmatprep.subr.mxu0 0.0
        %242 = vmatpush1.msra.mxu0 0.0
        %243 = vmatprep.subr.mxu0 0.0
        %244 = vmatpush1.msra.mxu0 0.0
        %245 = vmatprep.subr.mxu0 0.0
        %246 = vmatpush1.msra.mxu0 0.0
        %247 = vmatprep.subr.mxu0 0.0
        %248 = vmatpush1.msra.mxu0 0.0
        %249 = vmatprep.subr.mxu0 0.0
        %250 = vmatpush1.msra.mxu0 0.0
        %251 = vmatprep.subr.mxu0 0.0
        %252 = vmatpush1.msra.mxu0 0.0
        %253 = vmatprep.subr.mxu0 0.0
        %254 = vmatpush1.msra.mxu0 0.0
        %255 = vmatprep.subr.mxu0 0.0
        %256 = vmatpush1.msra.mxu0 0.0
        %257 = vmatprep.subr.mxu0 0.0
        %258 = vmatpush1.msra.mxu0 0.0
        %259 = vmatprep.mubr.f32.mxu0 0.0
        %260 = vmatmul.mubr.f32.gmra.mrb[0].mxu0 %v186
        %v261 = vpop.f32.mrb[0].mxu0
        %v262 = vadd.f32 0.0, %v261
        %v263 = vpop.f32.mrb[0].mxu0
        %v264 = vadd.f32 0.0, %v263
        %265 = vdwg.mxu0
        %266 = vst [vmem:[%s161] sm:$0xff] %v262
        %267 = vst [vmem:[%s161 + $0x8] sm:$0xff] %v264
        %s268 = sand.u32 %s87, 1
        %s269 = scalar_lea.sflag [#allocation3], %s268
        %s270 = sand.u32 %s87, 1
        %s271 = smul.addr %s270, 16
        %s272 = scalar_lea.vmem [#allocation2], %s271
        // Predicated region
        $region29: #{tpu_custom_call.1} parent=27 // pred_check
          %p273 = pneg %p97
        $region30: #{tpu_custom_call.1} parent=27 // pred_check_branch
          %275 = sbr.rel (%p273) target = $region32
        $region31: #{tpu_custom_call.1} parent=27 // pred_region
          %s276 = smul.u32 2, %s21
          %s278 = ssub.s32 256, 256
          %279 = vsyncadd %s269, %s278
          %s280 = smul.addr %s20, 2
          %s281 = sadd.s32 %s276, %s280
          %s282 = smul.addr %s281, 128
          %s283 = scalar_lea.hbm %s2, %s282
          %s285 = sshll.u32 %s272, 4
          %s286 = int_to_ptr.vmem [resolvable:$true] %s285
          %288 = dma.vmem_to_hbm [thread:$0]  %s286, 256, %s283, %s269
        $region32: #{tpu_custom_call.1} parent=27 // pred_fallthru
          _
      $region28: #{tpu_custom_call.1} parent=5 // pred_fallthru
        _
      %p289 = scmp.le.s32.totalorder 2, %s11
      // Predicated region
      $region33: #{tpu_custom_call.1} parent=5 // pred_check
        %p290 = pneg %p289
      $region34: #{tpu_custom_call.1} parent=5 // pred_check_branch
        %292 = sbr.rel (%p290) target = $region36
      $region35: #{tpu_custom_call.1} parent=5 // pred_region
        %s293 = ssub.s32 %s11, 2
        // Predicated region
        $region37: #{tpu_custom_call.1} parent=35 // pred_check
          %p294 = pneg %p103
        $region38: #{tpu_custom_call.1} parent=35 // pred_check_branch
          %296 = sbr.rel (%p294) target = $region40
        $region39: #{tpu_custom_call.1} parent=35 // pred_region
          %s297 = sand.u32 %s88, 1
          %s298 = scalar_lea.sflag [#allocation3], %s297
          %s299 = sand.u32 %s88, 1
          %s300 = smul.addr %s299, 16
          %s301 = scalar_lea.vmem [#allocation2], %s300
          %302 = dma.done %s298, 256
        $region40: #{tpu_custom_call.1} parent=35 // pred_fallthru
          _
      $region36: #{tpu_custom_call.1} parent=5 // pred_fallthru
        _
    $region6: #{tpu_custom_call.1} parent=1 // loop_footer
      %s15 = sadd.s32 1, %s11
    $region7: #{tpu_custom_call.1} parent=1 // loop_footer_branch
      %10 = sbr.rel target = $region3
    $region8: #{tpu_custom_call.1} parent=1 // loop_exit
      _
    %303 = vsyncpa [#allocation3], 1
    %s304 = scalar_lea.sflag [#allocation3], 1
    %305 = vsyncpa %s304, 1

</llo_original>
